<compile_context>
chip_gen: v6e
topology: v6e:2x2x1
jax: 0.10.0
libtpu: 0.0.40
codegen_flags: <defaults>
</compile_context>

<pallas_src>
import math

import jax
import jax.numpy as jnp
from jax.experimental import pallas as pl
from jax.experimental.pallas import tpu as pltpu

_LANE = 128
# Per x/out block target. Double-buffered in + out streams => ~4x this resident,
# i.e. ~32 MiB, comfortably under the 48 MiB scoped-VMEM limit below.
_TARGET_BLOCK_BYTES = 8 * 1024 * 1024
# 48 MiB: leaves ~16 MiB headroom on v7x (64 MiB physical per TC); v5e/v6e have
# 128 MiB physical so this is always safe.
_VMEM_LIMIT_BYTES = 48 * 1024 * 1024
# Don't expand the scale vector beyond this width via the lcm trick.
_MAX_LANE_DENSE_WIDTH = 65536


def _scale_kernel(scale_ref, x_ref, o_ref):
    # x_ref: (tile_rows, tile_w); scale_ref: (1, tile_w).
    # 1 vld + 1 vmul + 1 vst per vreg; the (1, W) operand sublane-broadcasts on
    # the VPU and is fully hidden under the HBM DMAs (HBM-bound on v5e/v6e/v7x).
    o_ref[...] = x_ref[...] * scale_ref[...]


def _sublane_multiple(dtype) -> int:
    # Sub-32-bit dtypes pack along sublanes: f32 -> 8, bf16 -> 16, int8/fp8 -> 32.
    itemsize = jnp.dtype(dtype).itemsize
    return max(8, 8 * (4 // itemsize))


def scale_layer(
    x: jax.Array,
    scale: jax.Array,
    *,
    row_tile: int | None = None,
    block_bytes: int = _TARGET_BLOCK_BYTES,
) -> jax.Array:
    """Elementwise `scale * x`, scale broadcast along the last axis of x."""
    orig_shape = x.shape
    (D,) = scale.shape
    assert orig_shape[-1] == D, (orig_shape, D)

    total = x.size
    itemsize = jnp.dtype(x.dtype).itemsize
    sublane = _sublane_multiple(x.dtype)

    # ---- choose a lane-dense 2D view --------------------------------------
    # width = lcm(D, 128): fully populated vregs and unmasked full-width stores
    # whenever the flattened size allows it (D=32 -> 128, D=48 -> 384, ...).
    width = math.lcm(D, _LANE)
    if total % width == 0 and width <= _MAX_LANE_DENSE_WIDTH:
        reps = width // D
        scale_row = scale if reps == 1 else jnp.tile(scale, reps)
    else:
        # General fallback: correct, but stores are lane-masked for width < 128.
        width = D
        scale_row = scale

    rows = total // width
    x2d = x.reshape(rows, width)
    # NOTE: scale is cast to x.dtype, so for sub-f32 inputs the multiply happens
    # in x's precision (cheaper; differs at most by one rounding from fp32-mul).
    scale2d = scale_row.astype(x.dtype).reshape(1, width)

    # ---- width tiling (only needed for very wide lane-dense rows) ----------
    if width * itemsize * sublane <= block_bytes or width % _LANE != 0:
        tile_w = width
    else:
        lanes = max(_LANE, (block_bytes // (sublane * itemsize)) // _LANE * _LANE)
        tile_w = min(lanes, width)
    n_col = pl.cdiv(width, tile_w)

    # ---- row tiling: sublane-aligned, VMEM-budgeted ------------------------
    max_rows = max(sublane, (block_bytes // (tile_w * itemsize)) // sublane * sublane)
    if row_tile is None:
        tile_rows = max_rows
    else:
        tile_rows = max(sublane, (min(row_tile, max_rows) // sublane) * sublane)

    # Keep >= 2 grid steps when possible: v7x has 2 TCs to shard the "parallel"
    # axis across, and a single-step grid has nothing to pipeline.
    if n_col == 1 and rows >= 2 * sublane:
        g = pl.cdiv(rows, sublane)
        tile_rows = min(tile_rows, pl.cdiv(g, 2) * sublane)

    if tile_rows >= rows:
        tile_rows = rows  # full-dim block: always layout-legal
    n_row = pl.cdiv(rows, tile_rows)
    grid = (n_row, n_col)

    cost = pl.CostEstimate(
        flops=total,
        transcendentals=0,
        bytes_accessed=2 * total * itemsize + width * itemsize,
    )

    out2d = pl.pallas_call(
        _scale_kernel,
        out_shape=jax.ShapeDtypeStruct((rows, width), x.dtype),
        grid_spec=pltpu.PrefetchScalarGridSpec(
            num_scalar_prefetch=0,
            grid=grid,
            in_specs=[
                pl.BlockSpec((1, tile_w), lambda r, c: (0, c)),          # scale
                pl.BlockSpec((tile_rows, tile_w), lambda r, c: (r, c)),  # x tile
            ],
            out_specs=pl.BlockSpec((tile_rows, tile_w), lambda r, c: (r, c)),
        ),
        compiler_params=pltpu.CompilerParams(
            dimension_semantics=("parallel", "parallel"),  # fully independent tiles
            vmem_limit_bytes=_VMEM_LIMIT_BYTES,
        ),
        cost_estimate=cost,
    )(scale2d, x2d)

    return out2d.reshape(orig_shape)


if __name__ == "__main__":
    SIZE = 32
    INIT_VALUE = 0.001
    k0, k1, k2, k3 = jax.random.split(jax.random.PRNGKey(0), 4)

    # ScaleLayer(size=32): nn.Parameter(torch.FloatTensor(size).fill_(0.001)).
    scale = jnp.full((SIZE,), INIT_VALUE, dtype=jnp.float32)

    # Small deterministic input: (batch=2, seq=8, hidden=32). Lane-dense path.
    x = jax.random.normal(k0, (2, 8, SIZE), dtype=jnp.float32)
    out = jax.block_until_ready(scale_layer(x, scale))
    assert out.shape == x.shape
    assert jnp.allclose(out, scale * x, atol=1e-6, rtol=1e-6)

    # Multi-step pipelined row grid (lane-dense path, several grid steps).
    x2 = jax.random.normal(k1, (4, 256, SIZE), dtype=jnp.float32)
    out2 = jax.block_until_ready(scale_layer(x2, scale, row_tile=64))
    assert jnp.allclose(out2, scale * x2, atol=1e-6, rtol=1e-6)

    # LCM lane-dense path (D=48 -> width=384) and the non-dense fallback
    # (total not divisible by lcm(48, 128)).
    scale3 = jnp.full((48,), INIT_VALUE, dtype=jnp.float32)
    x3 = jax.random.normal(k2, (2, 16, 48), dtype=jnp.float32)
    out3 = jax.block_until_ready(scale_layer(x3, scale3))
    assert jnp.allclose(out3, scale3 * x3, atol=1e-6, rtol=1e-6)
    x3b = jax.random.normal(k2, (1, 5, 48), dtype=jnp.float32)
    out3b = jax.block_until_ready(scale_layer(x3b, scale3))
    assert jnp.allclose(out3b, scale3 * x3b, atol=1e-6, rtol=1e-6)

    # 2D (row, width) grid path: force a column split with a tiny block budget.
    scale4 = jnp.full((256,), INIT_VALUE, dtype=jnp.float32)
    x4 = jax.random.normal(k3, (2, 8, 256), dtype=jnp.float32)
    out4 = jax.block_until_ready(scale_layer(x4, scale4, block_bytes=4096))
    assert jnp.allclose(out4, scale4 * x4, atol=1e-6, rtol=1e-6)

    # bf16 input: exercises the 16-row sublane packing and dtype cast of scale.
    x5 = jax.random.normal(k1, (2, 64, SIZE), dtype=jnp.bfloat16)
    out5 = jax.block_until_ready(scale_layer(x5, scale))
    ref5 = (scale.astype(jnp.bfloat16) * x5).astype(jnp.float32)
    assert jnp.allclose(out5.astype(jnp.float32), ref5, atol=1e-4, rtol=2e-2)

    print("KERNEL_OK")
</pallas_src>

<mosaic_0001>
module attributes {stable_mosaic.version = 11 : i64} {
  func.func @_scale_kernel(%arg0: i32, %arg1: i32, %arg2: memref<1x128xf32, #tpu.memory_space<vmem>>, %arg3: memref<4x128xf32, #tpu.memory_space<vmem>>, %arg4: memref<4x128xf32, #tpu.memory_space<vmem>>) attributes {dimension_semantics = [#tpu.dimension_semantics<parallel>, #tpu.dimension_semantics<parallel>], iteration_bounds = array<i64: 1, 1>, scalar_prefetch = 0 : i64, scratch_operands = 0 : i64, tpu.core_type = #tpu.core_type<tc>, window_params = [{transform_indices = @transform_0, window_bounds = array<i64: 1, 128>}, {transform_indices = @transform_1, window_bounds = array<i64: 4, 128>}, {transform_indices = @transform_2, window_bounds = array<i64: 4, 128>}]} {
    %c0 = arith.constant 0 : index
    %c0_0 = arith.constant 0 : index
    %0 = vector.load %arg3[%c0, %c0_0] : memref<4x128xf32, #tpu.memory_space<vmem>>, vector<4x128xf32>
    %c0_1 = arith.constant 0 : index
    %c0_2 = arith.constant 0 : index
    %1 = vector.load %arg2[%c0_1, %c0_2] : memref<1x128xf32, #tpu.memory_space<vmem>>, vector<1x128xf32>
    %2 = vector.broadcast %1 : vector<1x128xf32> to vector<4x128xf32>
    %3 = arith.mulf %0, %2 : vector<4x128xf32>
    %c0_3 = arith.constant 0 : index
    %c0_4 = arith.constant 0 : index
    %4 = vector.load %arg4[%c0_3, %c0_4] : memref<4x128xf32, #tpu.memory_space<vmem>>, vector<4x128xf32>
    tpu.vector_store %arg4[%c0_3, %c0_4], %3 {strides = array<i32>} : memref<4x128xf32, #tpu.memory_space<vmem>>, vector<4x128xf32>,
    return
  }
  func.func @transform_0(%arg0: i32, %arg1: i32) -> (i32, i32) {
    %c0_i32 = arith.constant 0 : i32
    %c0_i32_0 = arith.constant 0 : i32
    return %c0_i32, %arg1 : i32, i32
  }
  func.func @transform_1(%arg0: i32, %arg1: i32) -> (i32, i32) {
    %c0_i32 = arith.constant 0 : i32
    return %arg0, %arg1 : i32, i32
  }
  func.func @transform_2(%arg0: i32, %arg1: i32) -> (i32, i32) {
    %c0_i32 = arith.constant 0 : i32
    return %arg0, %arg1 : i32, i32
  }
}

</mosaic_0001>

<llo_original>
// kernel: tpu_custom_call.1
$region0: #{tpu_custom_call.1}
  #allocation0 [shape = 'u32[]', space=smem, size = 0x4, offset = 0x4, fixed_abs, tag = 'smem constant byte address 0x4 - core index']
  #allocation1 [shape = 'u32[144,128]{1,0:T(1,128)}', space=vmem, size = 0x12000, scoped, tag = 'internal scratch']
  %s0 = inlined_call_operand.hbm [shape: f32[1,128], index: 0, kind: input, shape index: {}]
  %s1 = inlined_call_operand.hbm [shape: f32[4,128], index: 1, kind: input, shape index: {}]
  %s2 = inlined_call_operand.hbm [shape: f32[4,128], index: 2, kind: output, shape index: {}]
  %s3 = sld [smem:[#allocation0]]
  $region26: #{tpu_custom_call.1} parent=0
    _
  %s5 = ssub.s32 1, %s3
  %s6 = scalar_select 0, %s5, %s3
  $region1: #{tpu_custom_call.1} parent=0
    #allocation2 [shape = 'u8[512]{0}', space=vmem, size = 0x400, scoped, tag = 'input window, operand 0, single buffered']
    #allocation3 [shape = 's32[1]{0}', space=sflag, size = 0x4, scoped, tag = 'scoped memory for tpu_custom_call.1']
    #allocation4 [shape = 's32[1]{0}', space=sflag, size = 0x4, scoped, tag = 'scoped memory for tpu_custom_call.1']
    #allocation5 [shape = 'u8[2048]{0}', space=vmem, size = 0x800, scoped, tag = 'input window, operand 1, single buffered']
    #allocation6 [shape = 's32[1]{0}', space=sflag, size = 0x4, scoped, tag = 'scoped memory for tpu_custom_call.1']
    #allocation7 [shape = 'u8[2048]{0}', space=vmem, size = 0x800, scoped, tag = 'output window, operand 0, single buffered']
    %7 = vsyncpa [#allocation3], 0
    %8 = vsyncpa [#allocation6], 0
    %9 = vsyncpa [#allocation4], 0
    // Predicated region
    $region2: #{tpu_custom_call.1} parent=1 // pred_check
      _
    $region3: #{tpu_custom_call.1} parent=1 // pred_check_branch
      %11 = sbr.rel (0) target = $region5
    $region4: #{tpu_custom_call.1} parent=1 // pred_region
      %s13 = ssub.s32 16, 16
      %14 = vsyncadd [#allocation3], %s13
      %s16 = sshll.u32 [#allocation2], 4
      %s17 = int_to_ptr.vmem [resolvable:$true] %s16
      %19 = dma.hbm_to_vmem [thread:$0]  %s0, 16, %s17, [#allocation3]
    $region5: #{tpu_custom_call.1} parent=1 // pred_fallthru
      _
    // Predicated region
    $region6: #{tpu_custom_call.1} parent=1 // pred_check
      _
    $region7: #{tpu_custom_call.1} parent=1 // pred_check_branch
      %21 = sbr.rel (0) target = $region9
    $region8: #{tpu_custom_call.1} parent=1 // pred_region
      %s23 = ssub.s32 64, 64
      %24 = vsyncadd [#allocation6], %s23
      %s26 = sshll.u32 [#allocation5], 4
      %s27 = int_to_ptr.vmem [resolvable:$true] %s26
      %29 = dma.hbm_to_vmem [thread:$0]  %s1, 64, %s27, [#allocation6]
    $region9: #{tpu_custom_call.1} parent=1 // pred_fallthru
      _
    // Predicated region
    $region10: #{tpu_custom_call.1} parent=1 // pred_check
      _
    $region11: #{tpu_custom_call.1} parent=1 // pred_check_branch
      %31 = sbr.rel (0) target = $region13
    $region12: #{tpu_custom_call.1} parent=1 // pred_region
      %32 = dma.done [#allocation3], 16
    $region13: #{tpu_custom_call.1} parent=1 // pred_fallthru
      _
    // Predicated region
    $region14: #{tpu_custom_call.1} parent=1 // pred_check
      _
    $region15: #{tpu_custom_call.1} parent=1 // pred_check_branch
      %34 = sbr.rel (0) target = $region17
    $region16: #{tpu_custom_call.1} parent=1 // pred_region
      %35 = dma.done [#allocation6], 64
    $region17: #{tpu_custom_call.1} parent=1 // pred_fallthru
      _
    %v36 = vld [vmem:[#allocation5] sm:$0xf]
    %v37 = vld [vmem:[#allocation2] sm:$0x1]
    %v39 = vlaneseq
    %v40 = vshrl.u32 %v39, 7
    %v41 = vsub.s32 0, %v40
    %v42 = vrot.slane %v37, %v41
    %v44 = vmul.f32 %v36, %v42
    %45 = vst [vmem:[#allocation7] sm:$0xf] %v44
    // Predicated region
    $region18: #{tpu_custom_call.1} parent=1 // pred_check
      _
    $region19: #{tpu_custom_call.1} parent=1 // pred_check_branch
      %47 = sbr.rel (0) target = $region21
    $region20: #{tpu_custom_call.1} parent=1 // pred_region
      %s49 = ssub.s32 64, 64
      %50 = vsyncadd [#allocation4], %s49
      %s52 = sshll.u32 [#allocation7], 4
      %s53 = int_to_ptr.vmem [resolvable:$true] %s52
      %55 = dma.vmem_to_hbm [thread:$0]  %s53, 64, %s2, [#allocation4]
    $region21: #{tpu_custom_call.1} parent=1 // pred_fallthru
      _
    // Predicated region
    $region22: #{tpu_custom_call.1} parent=1 // pred_check
      _
    $region23: #{tpu_custom_call.1} parent=1 // pred_check_branch
      %57 = sbr.rel (0) target = $region25
    $region24: #{tpu_custom_call.1} parent=1 // pred_region
      %58 = dma.done [#allocation4], 64
    $region25: #{tpu_custom_call.1} parent=1 // pred_fallthru
      _
    %59 = vsyncpa [#allocation3], 1
    %60 = vsyncpa [#allocation6], 1
    %61 = vsyncpa [#allocation4], 1

</llo_original>
